<compile_context>
chip_gen: v7x
topology: tpu7x:2x2x1
jax: 0.10.0
libtpu: 0.0.40
codegen_flags: <defaults>
</compile_context>

<pallas_src>
import jax
import jax.numpy as jnp
from jax.experimental import pallas as pl
from jax.experimental.pallas import tpu as pltpu


def _fused_gcn_kernel(x_ref, m_ref, b_ref, o_ref):
    # x_ref: (TILE_NT, V*C_in)   m_ref: (V*C_in, V*C_out)   b_ref: (1, V*C_out)
    y = jnp.dot(x_ref[...], m_ref[...], preferred_element_type=jnp.float32)
    o_ref[...] = (y + b_ref[...]).astype(o_ref.dtype)


def pygeo_conv_gcn(x, adj, weight, bias, *, tile_nt=512, compute_dtype=jnp.float32):
    """PyGeoConv('gcn') forward.

    x:      (N, C_in, T, V)  float32
    adj:    (K, V, V)        float32
    weight: (K*C_out, C_in, 1, 1)  (nn.Conv2d(C_in, K*C_out, (1,1)) weight)
    bias:   (K*C_out,)
    Returns (out, adj) with out: (N, C_out, T, V), matching PyTorch.
    """
    N, C_in, T, V = x.shape
    K = adj.shape[0]
    C_out = weight.shape[0] // K
    NT = N * T

    # ---- Fuse conv weights with adjacency (wrapper-side, tiny tensors) ----
    w_k = weight.reshape(K, C_out, C_in).astype(jnp.float32)            # (K, C_out, C_in)
    # M4[v, ci, w, co] = sum_k w_k[k, co, ci] * adj[k, v, w]
    M = jnp.einsum("koc,kvw->vcwo", w_k, adj).reshape(V * C_in, V * C_out)
    b_comb = jnp.einsum("ko,kvw->wo", bias.reshape(K, C_out).astype(jnp.float32),
                        adj).reshape(1, V * C_out)                       # stays f32 (VPU add)

    # ---- Token-major input layout: x2d[nt, v*C_in + ci] = x[n, ci, t, v] ----
    # (Downstream consumers could keep this layout to drop both transposes.)
    x2d = jnp.transpose(x, (0, 2, 3, 1)).reshape(NT, V * C_in)

    # Optional low-precision MXU inputs (v6e/v7x); accumulation stays f32.
    x2d = x2d.astype(compute_dtype)
    M = M.astype(compute_dtype)

    # ---- Tile the NT axis; pad so the tile divides evenly ----
    if NT >= 8:
        tile = max(8, (min(tile_nt, NT) // 8) * 8)
    else:
        tile = NT
    grid_nt = pl.cdiv(NT, tile)
    NT_pad = grid_nt * tile
    if NT_pad != NT:
        x2d = jnp.pad(x2d, ((0, NT_pad - NT), (0, 0)))

    out_flat = pl.pallas_call(
        _fused_gcn_kernel,
        out_shape=jax.ShapeDtypeStruct((NT_pad, V * C_out), jnp.float32),
        grid=(grid_nt,),
        in_specs=[
            pl.BlockSpec((tile, V * C_in), lambda i: (i, 0)),
            pl.BlockSpec((V * C_in, V * C_out), lambda i: (0, 0)),   # full, resident
            pl.BlockSpec((1, V * C_out), lambda i: (0, 0)),          # full, resident
        ],
        out_specs=pl.BlockSpec((tile, V * C_out), lambda i: (i, 0)),
        compiler_params=pltpu.CompilerParams(
            dimension_semantics=("parallel",),
        ),
    )(x2d, M, b_comb)

    # Back to PyTorch layout: (N, C_out, T, V)
    out = out_flat[:NT].reshape(N, T, V, C_out).transpose(0, 3, 1, 2)
    return out, adj


def _reference(x, adj, weight, bias):
    """Pure-JAX reference mirroring the PyTorch code."""
    N, C_in, T, V = x.shape
    K = adj.shape[0]
    C_out = weight.shape[0] // K
    w2d = weight.reshape(K * C_out, C_in)
    y = jnp.einsum("nctv,oc->notv", x, w2d) + bias[None, :, None, None]
    y = y.reshape(N, K, C_out, T, V)
    return jnp.einsum("nkctv,kvw->nctw", y, adj)


if __name__ == "__main__":
    # Small, deterministic example shapes (matching ConvTemporalGraphical usage).
    N, C_in, T, V = 2, 4, 8, 16
    C_out, K = 8, 3

    key = jax.random.PRNGKey(0)
    kx, kadj, kw, kb = jax.random.split(key, 4)

    x = jax.random.normal(kx, (N, C_in, T, V), dtype=jnp.float32)
    adj = jax.random.normal(kadj, (K, V, V), dtype=jnp.float32)
    weight = jax.random.normal(kw, (K * C_out, C_in, 1, 1), dtype=jnp.float32) * 0.1
    bias = jax.random.normal(kb, (K * C_out,), dtype=jnp.float32) * 0.1

    ref = _reference(x, adj, weight, bias)

    # f32 path (exact to tight tolerance).
    out, adj_out = jax.jit(pygeo_conv_gcn)(x, adj, weight, bias)
    jax.block_until_ready(out)
    assert out.shape == (N, C_out, T, V), out.shape
    assert jnp.allclose(out, ref, atol=1e-4, rtol=1e-4), float(jnp.max(jnp.abs(out - ref)))
    assert jnp.array_equal(adj_out, adj)

    # bf16 MXU-input path (v6e/v7x option): f32 accumulation, loose tolerance.
    out_bf, _ = jax.jit(
        lambda a, b, c, d: pygeo_conv_gcn(a, b, c, d, compute_dtype=jnp.bfloat16)
    )(x, adj, weight, bias)
    jax.block_until_ready(out_bf)
    assert float(jnp.max(jnp.abs(out_bf - ref))) < 0.1

    print("KERNEL_OK")
</pallas_src>

<mosaic_0001>
module attributes {stable_mosaic.version = 11 : i64} {
  func.func @_fused_gcn_kernel(%arg0: i32, %arg1: memref<16x64xf32, #tpu.memory_space<vmem>>, %arg2: memref<64x128xf32, #tpu.memory_space<vmem>>, %arg3: memref<1x128xf32, #tpu.memory_space<vmem>>, %arg4: memref<16x128xf32, #tpu.memory_space<vmem>>) attributes {dimension_semantics = [#tpu.dimension_semantics<parallel>], iteration_bounds = array<i64: 1>, scalar_prefetch = 0 : i64, scratch_operands = 0 : i64, tpu.core_type = #tpu.core_type<tc>, window_params = [{transform_indices = @transform_0, window_bounds = array<i64: 16, 64>}, {pipeline_mode = #tpu.pipeline_mode<synchronous>, transform_indices = @transform_1, window_bounds = array<i64: 64, 128>}, {pipeline_mode = #tpu.pipeline_mode<synchronous>, transform_indices = @transform_2, window_bounds = array<i64: 1, 128>}, {transform_indices = @transform_3, window_bounds = array<i64: 16, 128>}]} {
    %c0 = arith.constant 0 : index
    %c0_0 = arith.constant 0 : index
    %0 = vector.load %arg1[%c0, %c0_0] : memref<16x64xf32, #tpu.memory_space<vmem>>, vector<16x64xf32>
    %c0_1 = arith.constant 0 : index
    %c0_2 = arith.constant 0 : index
    %1 = vector.load %arg2[%c0_1, %c0_2] : memref<64x128xf32, #tpu.memory_space<vmem>>, vector<64x128xf32>
    %cst = arith.constant dense<0.000000e+00> : vector<16x128xf32>
    %2 = tpu.matmul %0, %1, %cst {dimension_numbers = #tpu.dot_dimension_numbers<[1], [0], [0], [1], [0, 0, 1, 1], [], []>} : vector<16x64xf32>, vector<64x128xf32>, vector<16x128xf32> -> vector<16x128xf32>
    %c0_3 = arith.constant 0 : index
    %c0_4 = arith.constant 0 : index
    %3 = vector.load %arg3[%c0_3, %c0_4] : memref<1x128xf32, #tpu.memory_space<vmem>>, vector<1x128xf32>
    %4 = vector.broadcast %3 : vector<1x128xf32> to vector<16x128xf32>
    %5 = arith.addf %2, %4 : vector<16x128xf32>
    %c0_5 = arith.constant 0 : index
    %c0_6 = arith.constant 0 : index
    %6 = vector.load %arg4[%c0_5, %c0_6] : memref<16x128xf32, #tpu.memory_space<vmem>>, vector<16x128xf32>
    tpu.vector_store %arg4[%c0_5, %c0_6], %5 {strides = array<i32>} : memref<16x128xf32, #tpu.memory_space<vmem>>, vector<16x128xf32>,
    return
  }
  func.func @transform_0(%arg0: i32) -> (i32, i32) {
    %c0_i32 = arith.constant 0 : i32
    %c0_i32_0 = arith.constant 0 : i32
    return %arg0, %c0_i32 : i32, i32
  }
  func.func @transform_1(%arg0: i32) -> (i32, i32) {
    %c0_i32 = arith.constant 0 : i32
    %c0_i32_0 = arith.constant 0 : i32
    %c0_i32_1 = arith.constant 0 : i32
    return %c0_i32, %c0_i32_0 : i32, i32
  }
  func.func @transform_2(%arg0: i32) -> (i32, i32) {
    %c0_i32 = arith.constant 0 : i32
    %c0_i32_0 = arith.constant 0 : i32
    %c0_i32_1 = arith.constant 0 : i32
    return %c0_i32, %c0_i32_0 : i32, i32
  }
  func.func @transform_3(%arg0: i32) -> (i32, i32) {
    %c0_i32 = arith.constant 0 : i32
    %c0_i32_0 = arith.constant 0 : i32
    return %arg0, %c0_i32 : i32, i32
  }
}

</mosaic_0001>

<llo_original>
// kernel: pygeo_conv_gcn.1
$region0: #{pygeo_conv_gcn.1}
  #allocation0 [shape = 'u32[]', space=smem, size = 0x4, offset = 0x4, fixed_abs, tag = 'smem constant byte address 0x4 - core index']
  #allocation1 [shape = 'u32[144,128]{1,0:T(1,128)}', space=vmem, size = 0x12000, scoped, tag = 'internal scratch']
  %s0 = inlined_call_operand.vmem [shape: f32[16,64], index: 0, kind: input, shape index: {}]
  %s1 = inlined_call_operand.vmem [shape: f32[64,128], index: 1, kind: input, shape index: {}]
  %s2 = inlined_call_operand.vmem [shape: f32[1,128], index: 2, kind: input, shape index: {}]
  %s3 = inlined_call_operand.vmem [shape: f32[16,128], index: 3, kind: output, shape index: {}]
  %s4 = sld [smem:[#allocation0]]
  $region22: #{pygeo_conv_gcn.1} parent=0
    _
  %s6 = ssub.s32 1, %s4
  %s7 = scalar_select 0, %s6, %s4
  // Predicated region
  $region2: #{pygeo_conv_gcn.1} parent=0 // pred_check
    _
  $region3: #{pygeo_conv_gcn.1} parent=0 // pred_check_branch
    %9 = sbr.rel (0) target = $region5
  $region4: #{pygeo_conv_gcn.1} parent=0 // pred_region
    _
  $region5: #{pygeo_conv_gcn.1} parent=0 // pred_fallthru
    _
  // Predicated region
  $region6: #{pygeo_conv_gcn.1} parent=0 // pred_check
    _
  $region7: #{pygeo_conv_gcn.1} parent=0 // pred_check_branch
    %11 = sbr.rel (0) target = $region9
  $region8: #{pygeo_conv_gcn.1} parent=0 // pred_region
    _
  $region9: #{pygeo_conv_gcn.1} parent=0 // pred_fallthru
    _
  // Predicated region
  $region10: #{pygeo_conv_gcn.1} parent=0 // pred_check
    _
  $region11: #{pygeo_conv_gcn.1} parent=0 // pred_check_branch
    %13 = sbr.rel (0) target = $region13
  $region12: #{pygeo_conv_gcn.1} parent=0 // pred_region
    _
  $region13: #{pygeo_conv_gcn.1} parent=0 // pred_fallthru
    _
  %v14 = vld [vmem:[%s0] sm:$0xff]
  %v15 = vld [vmem:[%s0 + $0x8] sm:$0xff]
  %v16 = vld [vmem:[%s1] sm:$0xff]
  %v17 = vld [vmem:[%s1 + $0x8] sm:$0xff]
  %v18 = vld [vmem:[%s1 + $0x10] sm:$0xff]
  %v19 = vld [vmem:[%s1 + $0x18] sm:$0xff]
  %v20 = vld [vmem:[%s1 + $0x20] sm:$0xff]
  %v21 = vld [vmem:[%s1 + $0x28] sm:$0xff]
  %v22 = vld [vmem:[%s1 + $0x30] sm:$0xff]
  %v23 = vld [vmem:[%s1 + $0x38] sm:$0xff]
  %v24 = vld [vmem:[%s2] sm:$0x1]
  %v26 = vlaneseq
  %v27 = vshrl.u32 %v26, 7
  %v28 = vsub.s32 0, %v27
  %v29 = vrot.slane %v24, %v28
  %vm31 = vcmask 523264
  %v33 = vsel %vm31, %v14, 0
  %v36 = vsel %vm31, %v15, 0
  %38 = vmatprep.subr.mxu0 0.0
  %39 = vmatpush1.msra.mxu0 %v16
  %40 = vmatprep.subr.mxu0 0.0
  %41 = vmatpush1.msra.mxu0 %v17
  %42 = vmatprep.subr.mxu0 0.0
  %43 = vmatpush1.msra.mxu0 %v18
  %44 = vmatprep.subr.mxu0 0.0
  %45 = vmatpush1.msra.mxu0 %v19
  %46 = vmatprep.subr.mxu0 0.0
  %47 = vmatpush1.msra.mxu0 %v20
  %48 = vmatprep.subr.mxu0 0.0
  %49 = vmatpush1.msra.mxu0 %v21
  %50 = vmatprep.subr.mxu0 0.0
  %51 = vmatpush1.msra.mxu0 %v22
  %52 = vmatprep.subr.mxu0 0.0
  %53 = vmatpush1.msra.mxu0 %v23
  %54 = vmatprep.subr.mxu0 0.0
  %55 = vmatpush1.msra.mxu0 0.0
  %56 = vmatprep.subr.mxu0 0.0
  %57 = vmatpush1.msra.mxu0 0.0
  %58 = vmatprep.subr.mxu0 0.0
  %59 = vmatpush1.msra.mxu0 0.0
  %60 = vmatprep.subr.mxu0 0.0
  %61 = vmatpush1.msra.mxu0 0.0
  %62 = vmatprep.subr.mxu0 0.0
  %63 = vmatpush1.msra.mxu0 0.0
  %64 = vmatprep.subr.mxu0 0.0
  %65 = vmatpush1.msra.mxu0 0.0
  %66 = vmatprep.subr.mxu0 0.0
  %67 = vmatpush1.msra.mxu0 0.0
  %68 = vmatprep.subr.mxu0 0.0
  %69 = vmatpush1.msra.mxu0 0.0
  %70 = vmatprep.subr.mxu0 0.0
  %71 = vmatpush1.msra.mxu0 0.0
  %72 = vmatprep.subr.mxu0 0.0
  %73 = vmatpush1.msra.mxu0 0.0
  %74 = vmatprep.subr.mxu0 0.0
  %75 = vmatpush1.msra.mxu0 0.0
  %76 = vmatprep.subr.mxu0 0.0
  %77 = vmatpush1.msra.mxu0 0.0
  %78 = vmatprep.subr.mxu0 0.0
  %79 = vmatpush1.msra.mxu0 0.0
  %80 = vmatprep.subr.mxu0 0.0
  %81 = vmatpush1.msra.mxu0 0.0
  %82 = vmatprep.subr.mxu0 0.0
  %83 = vmatpush1.msra.mxu0 0.0
  %84 = vmatprep.subr.mxu0 0.0
  %85 = vmatpush1.msra.mxu0 0.0
  %86 = vmatprep.subr.mxu0 0.0
  %87 = vmatpush1.msra.mxu0 0.0
  %88 = vmatprep.subr.mxu0 0.0
  %89 = vmatpush1.msra.mxu0 0.0
  %90 = vmatprep.subr.mxu0 0.0
  %91 = vmatpush1.msra.mxu0 0.0
  %92 = vmatprep.subr.mxu0 0.0
  %93 = vmatpush1.msra.mxu0 0.0
  %94 = vmatprep.subr.mxu0 0.0
  %95 = vmatpush1.msra.mxu0 0.0
  %96 = vmatprep.subr.mxu0 0.0
  %97 = vmatpush1.msra.mxu0 0.0
  %98 = vmatprep.subr.mxu0 0.0
  %99 = vmatpush1.msra.mxu0 0.0
  %100 = vmatprep.subr.mxu0 0.0
  %101 = vmatpush1.msra.mxu0 0.0
  %102 = vmatprep.mubr.f32.mxu0 0.0
  %103 = vmatmul.mubr.f32.gmra.mrb[0].mxu0 %v33
  %v104 = vpop.f32.mrb[0].mxu0
  %v105 = vadd.f32 %v29, %v104
  %v106 = vpop.f32.mrb[0].mxu0
  %107 = vmatprep.mubr.f32.mxu0 0.0
  %108 = vmatmul.mubr.f32.gmra.mrb[0].mxu0 %v36
  %v109 = vpop.f32.mrb[0].mxu0
  %v110 = vadd.f32 %v29, %v109
  %v111 = vpop.f32.mrb[0].mxu0
  %112 = vdwg.mxu0
  %113 = vst [vmem:[%s3] sm:$0xff] %v105
  %114 = vst [vmem:[%s3 + $0x8] sm:$0xff] %v110
  // Predicated region
  $region14: #{pygeo_conv_gcn.1} parent=0 // pred_check
    _
  $region15: #{pygeo_conv_gcn.1} parent=0 // pred_check_branch
    %116 = sbr.rel (0) target = $region17
  $region16: #{pygeo_conv_gcn.1} parent=0 // pred_region
    _
  $region17: #{pygeo_conv_gcn.1} parent=0 // pred_fallthru
    _
  // Predicated region
  $region18: #{pygeo_conv_gcn.1} parent=0 // pred_check
    _
  $region19: #{pygeo_conv_gcn.1} parent=0 // pred_check_branch
    %118 = sbr.rel (0) target = $region21
  $region20: #{pygeo_conv_gcn.1} parent=0 // pred_region
    _
  $region21: #{pygeo_conv_gcn.1} parent=0 // pred_fallthru
    _

</llo_original>
